<compile_context>
chip_gen: v7x
topology: tpu7x:2x2x1
jax: 0.10.0
libtpu: 0.0.40
codegen_flags: <defaults>
</compile_context>

<pallas_src>
import functools

import jax
import jax.numpy as jnp
from jax import lax
from jax.experimental import pallas as pl
from jax.experimental.pallas import tpu as pltpu

NEG_SLOPE = 0.2     # DGL GATConv default negative_slope
BN_EPS = 1e-5       # nn.BatchNorm1d default eps
NEG_INF = -1e30


def _pick_tile(n, candidates=(512, 256, 128)):
    """Largest standard tile dividing n; fall back to full extent (always legal)."""
    for c in candidates:
        if n % c == 0:
            return c
    return n


def _elementwise_dtype():
    """bf16 for the O(N^2) softmax chain only where VPU/EUP have a native bf16 path (v6e/v7x)."""
    try:
        kind = jax.devices()[0].device_kind.lower()
    except Exception:
        return jnp.float32
    return jnp.bfloat16 if ("v6" in kind or "v7" in kind) else jnp.float32


# -----------------------------------------------------------------------------
# Kernel 1: fused projection  [feat | res] = X @ [W_all | W_res] + [0 | gat_bias + b_res]
# -----------------------------------------------------------------------------
def project_kernel(x_ref, w_ref, bias_ref, feat_ref, res_ref, *, f_out):
    y = jnp.dot(x_ref[...], w_ref[...], preferred_element_type=jnp.float32) + bias_ref[...]
    feat_ref[...] = y[:, :f_out].astype(jnp.bfloat16)     # per-head projected features (bf16 for MXU)
    res_ref[...] = y[:, f_out:]                            # residual + (gat_bias + b_res), f32


# -----------------------------------------------------------------------------
# Kernel 2: tiled GAT attention (online softmax over src tiles) + residual add.
# Outputs pre-BN y and per-dst-tile (sum, sum of squares) BN partials.
# Relies on self-loops so every dst row has >= 1 incoming edge (as with DGL add_self_loop).
# -----------------------------------------------------------------------------
def gat_attend_kernel(adj_ref, feat_ref, res_ref, al_ref, ar_ref,
                      y_ref, stats_ref,
                      er_sc, m_sc, s_sc, acc_sc,
                      *, num_heads, head_dim, block_q, block_k, ew_dtype):
    i = pl.program_id(0)
    j = pl.program_id(1)
    nj = pl.num_programs(1)

    # Projected features are VMEM-resident (index map constant); slice the src rows we need.
    src0 = pl.multiple_of(j * block_k, block_k)
    fsrc = feat_ref[pl.ds(src0, block_k), :]                               # (tk, F_out) bf16

    @pl.when(j == 0)
    def _init():
        dst0 = pl.multiple_of(i * block_q, block_q)
        fdst = feat_ref[pl.ds(dst0, block_q), :]                           # (tq, F_out) bf16
        # er[v, h] on sublanes directly out of the MXU (attn_r folded into a block matrix).
        er_sc[...] = jnp.dot(fdst, ar_ref[...], preferred_element_type=jnp.float32)
        m_sc[...] = jnp.full(m_sc.shape, NEG_INF, jnp.float32)
        s_sc[...] = jnp.zeros_like(s_sc)
        acc_sc[...] = jnp.zeros_like(acc_sc)

    # el[h, u] on lanes directly out of the MXU -- no XLU transpose.
    el = lax.dot_general(al_ref[...], fsrc, (((1,), (1,)), ((), ())),
                         preferred_element_type=jnp.float32).astype(ew_dtype)   # (H, tk)
    non_edge = adj_ref[...] <= 0                                           # (tq, tk) bool, int8 mask

    for h in range(num_heads):                                             # small H: fully unrolled
        col = slice(h, h + 1)
        d = slice(h * head_dim, (h + 1) * head_dim)
        # Elementwise chain in ew_dtype (bf16 on v6e/v7x, f32 on v5e/older).
        e = er_sc[:, col].astype(ew_dtype) + el[h:h + 1, :]                # (tq, tk)
        e = jnp.where(e > 0, e, NEG_SLOPE * e)                             # LeakyReLU(0.2)
        e = jnp.where(non_edge, NEG_INF, e)
        m_old = m_sc[:, col]                                               # f32 running max
        m_new = jnp.maximum(m_old, jnp.max(e, axis=-1, keepdims=True).astype(jnp.float32))
        alpha = jnp.exp(m_old - m_new)                                     # f32 rescale (per dst row)
        # Masked logits give exp(-1e30 - m) -> 0; no extra select needed.
        p = jnp.exp(e - m_new.astype(ew_dtype))                            # (tq, tk) ew_dtype
        s_sc[:, col] = alpha * s_sc[:, col] + jnp.sum(p.astype(jnp.float32), axis=-1, keepdims=True)
        acc_sc[:, d] = alpha * acc_sc[:, d] + jnp.dot(
            p.astype(jnp.bfloat16), fsrc[:, d], preferred_element_type=jnp.float32)
        m_sc[:, col] = m_new

    @pl.when(j == nj - 1)
    def _finalize():
        res = res_ref[...]                                                 # residual + biases, f32
        inv_s = 1.0 / s_sc[...]                                            # exact; per dst row/head only
        for h in range(num_heads):                                         # in-place, no concatenate
            d = slice(h * head_dim, (h + 1) * head_dim)
            acc_sc[:, d] = acc_sc[:, d] * inv_s[:, h:h + 1] + res[:, d]
        y = acc_sc[...]
        y_ref[...] = y
        # BatchNorm partials for this dst tile (accumulate-then-finalize BN).
        stats_ref[...] = jnp.concatenate(
            [jnp.sum(y, axis=0, keepdims=True),
             jnp.sum(y * y, axis=0, keepdims=True)], axis=0)[None]


# -----------------------------------------------------------------------------
# Kernel 3: BatchNorm1d finalize from the accumulated per-tile partials.
# -----------------------------------------------------------------------------
def bn_finalize_kernel(stats_ref, y_ref, gamma_ref, beta_ref, out_ref, *, n_total):
    inv_n = 1.0 / n_total
    tot = jnp.sum(stats_ref[...], axis=0)                # (2, F_out): tiny reduce over dst tiles
    mean = tot[0:1, :] * inv_n
    var = tot[1:2, :] * inv_n - mean * mean              # biased batch variance (training-mode BN)
    scale = lax.rsqrt(var + BN_EPS) * gamma_ref[...]
    out_ref[...] = (y_ref[...] - mean) * scale + beta_ref[...]


# -----------------------------------------------------------------------------
# Wrapper
# -----------------------------------------------------------------------------
def gat_layer_forward(feats, adj, params, *, block_q=None, block_k=None, softmax_dtype=None):
    """feats: (N, F_in) f32, adj: (N, N) dense adjacency adj[dst, src] (used purely as a >0 mask)."""
    N, F_in = feats.shape
    w_fc = params["w_fc"]                      # (H, F_in, D)
    H, _, D = w_fc.shape
    F_out = H * D
    bf = jnp.bfloat16

    tq = block_q or _pick_tile(N)
    tk = block_k or _pick_tile(N)
    assert N % tq == 0 and N % tk == 0, "dst/src tile must divide N"
    n_q, n_k = N // tq, N // tk
    ew_dtype = softmax_dtype or _elementwise_dtype()

    # One-time parameter folding (plain JAX, outside the kernels).
    w_all = jnp.transpose(w_fc, (1, 0, 2)).reshape(F_in, F_out)            # head-major columns
    w_cat = jnp.concatenate([w_all, params["w_res"]], axis=1)              # fused [W_all | W_res]
    bias_cat = jnp.concatenate([jnp.zeros((1, F_out), jnp.float32),
                                params["gat_bias"] + params["b_res"]], axis=1)
    attn_l = params["attn_l"].reshape(H, D)
    attn_r = params["attn_r"].reshape(H, D)
    eye_h = jnp.eye(H, dtype=jnp.float32)
    al_blkT = (eye_h[:, :, None] * attn_l[:, None, :]).reshape(H, F_out)        # (H, H*D)
    ar_blk = (eye_h[:, :, None] * attn_r[:, None, :]).reshape(H, F_out).T       # (H*D, H)

    adj_mask = (adj > 0).astype(jnp.int8)      # adjacency is mask-only -> int8 halves HBM/VMEM bytes

    # --- kernel 1: fused projection (one wide MXU matmul per row tile) ---------------------------
    feat, resb = pl.pallas_call(
        functools.partial(project_kernel, f_out=F_out),
        out_shape=(jax.ShapeDtypeStruct((N, F_out), bf),
                   jax.ShapeDtypeStruct((N, F_out), jnp.float32)),
        grid=(n_q,),
        in_specs=[
            pl.BlockSpec((tq, F_in), lambda i: (i, 0)),
            pl.BlockSpec((F_in, 2 * F_out), lambda i: (0, 0)),
            pl.BlockSpec((1, 2 * F_out), lambda i: (0, 0)),
        ],
        out_specs=(pl.BlockSpec((tq, F_out), lambda i: (i, 0)),
                   pl.BlockSpec((tq, F_out), lambda i: (i, 0))),
        compiler_params=pltpu.CompilerParams(dimension_semantics=("parallel",)),
    )(feats.astype(bf), w_cat.astype(bf), bias_cat)

    # --- kernel 2: tiled attention + aggregation + residual, BN partials -------------------------
    # Adjacency is the only O(N^2) stream; default BlockSpec double-buffering overlaps its DMA.
    # VMEM per step ~ 2*tq*tk int8 + resident feat (N*F_out bf16) -- well under scoped limits.
    kernel = functools.partial(gat_attend_kernel, num_heads=H, head_dim=D,
                               block_q=tq, block_k=tk, ew_dtype=ew_dtype)
    y, stats = pl.pallas_call(
        kernel,
        out_shape=(jax.ShapeDtypeStruct((N, F_out), jnp.float32),
                   jax.ShapeDtypeStruct((n_q, 2, F_out), jnp.float32)),
        grid=(n_q, n_k),
        in_specs=[
            pl.BlockSpec((tq, tk), lambda i, j: (i, j)),       # adjacency tile (int8)
            pl.BlockSpec((N, F_out), lambda i, j: (0, 0)),     # projected feat, VMEM-resident
            pl.BlockSpec((tq, F_out), lambda i, j: (i, 0)),    # residual (+biases) for dst tile
            pl.BlockSpec((H, F_out), lambda i, j: (0, 0)),     # attn_l block (lane-oriented)
            pl.BlockSpec((F_out, H), lambda i, j: (0, 0)),     # attn_r block (sublane-oriented)
        ],
        out_specs=(pl.BlockSpec((tq, F_out), lambda i, j: (i, 0)),
                   pl.BlockSpec((1, 2, F_out), lambda i, j: (i, 0, 0))),
        scratch_shapes=[pltpu.VMEM((tq, H), jnp.float32),      # er (dst-side logits)
                        pltpu.VMEM((tq, H), jnp.float32),      # running max m
                        pltpu.VMEM((tq, H), jnp.float32),      # running sum s
                        pltpu.VMEM((tq, F_out), jnp.float32)], # per-head output accumulator
        compiler_params=pltpu.CompilerParams(
            dimension_semantics=("parallel", "arbitrary")),    # dst sharded across TCs on v7x
    )(adj_mask, feat, resb, al_blkT.astype(bf), ar_blk.astype(bf))

    # --- kernel 3: BatchNorm finalize --------------------------------------------------------------
    out = pl.pallas_call(
        functools.partial(bn_finalize_kernel, n_total=N),
        out_shape=jax.ShapeDtypeStruct((N, F_out), jnp.float32),
        grid=(n_q,),
        in_specs=[
            pl.BlockSpec((n_q, 2, F_out), lambda i: (0, 0, 0)),
            pl.BlockSpec((tq, F_out), lambda i: (i, 0)),
            pl.BlockSpec((1, F_out), lambda i: (0, 0)),
            pl.BlockSpec((1, F_out), lambda i: (0, 0)),
        ],
        out_specs=pl.BlockSpec((tq, F_out), lambda i: (i, 0)),
        compiler_params=pltpu.CompilerParams(dimension_semantics=("parallel",)),
    )(stats, y, params["bn_gamma"], params["bn_beta"])
    return out


def init_params(key, in_feats, out_feats, num_heads):
    D = out_feats // num_heads
    k1, k2, k3, k4, k5 = jax.random.split(key, 5)
    xav_fc = (2.0 / (in_feats + D)) ** 0.5
    xav_at = (2.0 / (1 + D)) ** 0.5
    return {
        "w_fc": xav_fc * jax.random.normal(k1, (num_heads, in_feats, D), jnp.float32),
        "attn_l": xav_at * jax.random.normal(k2, (num_heads, 1, D), jnp.float32),
        "attn_r": xav_at * jax.random.normal(k3, (num_heads, 1, D), jnp.float32),
        # DGL GATConv reset_parameters() zero-initializes its output bias
        "gat_bias": jnp.zeros((1, out_feats), jnp.float32),
        "w_res": (1.0 / in_feats ** 0.5) * jax.random.normal(k4, (in_feats, out_feats), jnp.float32),
        "b_res": (1.0 / in_feats ** 0.5) * jax.random.normal(k5, (1, out_feats), jnp.float32),
        # BatchNorm1d.reset_parameters(): weight=1, bias=0
        "bn_gamma": jnp.ones((1, out_feats), jnp.float32),
        "bn_beta": jnp.zeros((1, out_feats), jnp.float32),
    }


def _reference(feats, adj, params):
    """Pure-JAX reference: GATConv -> flatten -> + Linear residual -> BatchNorm1d (batch stats)."""
    H, _, D = params["w_fc"].shape
    N = feats.shape[0]
    feat = jnp.einsum("nf,hfd->nhd", feats, params["w_fc"])
    el = jnp.einsum("nhd,hd->nh", feat, params["attn_l"][:, 0, :])
    er = jnp.einsum("nhd,hd->nh", feat, params["attn_r"][:, 0, :])
    e = er[:, None, :] + el[None, :, :]                      # (dst, src, head)
    e = jnp.where(e > 0, e, NEG_SLOPE * e)
    mask = (adj > 0)[:, :, None]
    a = jax.nn.softmax(jnp.where(mask, e, -jnp.inf), axis=1)
    a = jnp.where(mask, a, 0.0)
    rst = jnp.einsum("vuh,uhd->vhd", a, feat).reshape(N, H * D)
    y = rst + params["gat_bias"] + feats @ params["w_res"] + params["b_res"]
    mean = y.mean(axis=0, keepdims=True)
    var = y.var(axis=0, keepdims=True)
    return (y - mean) / jnp.sqrt(var + BN_EPS) * params["bn_gamma"] + params["bn_beta"]


if __name__ == "__main__":
    N, IN_FEATS, OUT_FEATS, NUM_HEADS = 256, 32, 32, 4

    key = jax.random.PRNGKey(0)
    k_feat, k_adj, k_param = jax.random.split(key, 3)

    feats = jax.random.normal(k_feat, (N, IN_FEATS), jnp.float32)

    # Synthetic directed graph as dense adjacency adj[dst, src]; self-loops guarantee every
    # destination has at least one incoming edge (softmax denominator > 0, as with
    # DGL's usual add_self_loop preprocessing).
    adj = jax.random.bernoulli(k_adj, 0.05, (N, N)).astype(jnp.float32)
    adj = jnp.maximum(adj, jnp.eye(N, dtype=jnp.float32))

    params = init_params(k_param, IN_FEATS, OUT_FEATS, NUM_HEADS)

    # 128x128 tiles -> 2x2 grid: exercises the online-softmax src sweep, the parallel dst axis,
    # and the accumulate-then-finalize BatchNorm path.
    out = gat_layer_forward(feats, adj, params, block_q=128, block_k=128)
    jax.block_until_ready(out)
    assert out.shape == (N, OUT_FEATS) and out.dtype == jnp.float32

    ref = _reference(feats, adj, params)
    err = float(jnp.max(jnp.abs(out - ref)))
    assert err < 0.25, f"max abs error vs reference too large: {err}"

    print("KERNEL_OK")
</pallas_src>

<mosaic_0001>
module attributes {stable_mosaic.version = 11 : i64} {
  func.func @project_kernel(%arg0: i32, %arg1: memref<128x32xbf16, #tpu.memory_space<vmem>>, %arg2: memref<32x64xbf16, #tpu.memory_space<vmem>>, %arg3: memref<1x64xf32, #tpu.memory_space<vmem>>, %arg4: memref<128x32xbf16, #tpu.memory_space<vmem>>, %arg5: memref<128x32xf32, #tpu.memory_space<vmem>>) attributes {dimension_semantics = [#tpu.dimension_semantics<parallel>], iteration_bounds = array<i64: 2>, scalar_prefetch = 0 : i64, scratch_operands = 0 : i64, tpu.core_type = #tpu.core_type<tc>, window_params = [{transform_indices = @transform_0, window_bounds = array<i64: 128, 32>}, {pipeline_mode = #tpu.pipeline_mode<synchronous>, transform_indices = @transform_1, window_bounds = array<i64: 32, 64>}, {pipeline_mode = #tpu.pipeline_mode<synchronous>, transform_indices = @transform_2, window_bounds = array<i64: 1, 64>}, {transform_indices = @transform_3, window_bounds = array<i64: 128, 32>}, {transform_indices = @transform_4, window_bounds = array<i64: 128, 32>}]} {
    %c0 = arith.constant 0 : index
    %c0_0 = arith.constant 0 : index
    %0 = vector.load %arg1[%c0, %c0_0] : memref<128x32xbf16, #tpu.memory_space<vmem>>, vector<128x32xbf16>
    %c0_1 = arith.constant 0 : index
    %c0_2 = arith.constant 0 : index
    %1 = vector.load %arg2[%c0_1, %c0_2] : memref<32x64xbf16, #tpu.memory_space<vmem>>, vector<32x64xbf16>
    %cst = arith.constant dense<0.000000e+00> : vector<128x64xf32>
    %2 = tpu.matmul %0, %1, %cst {dimension_numbers = #tpu.dot_dimension_numbers<[1], [0], [0], [1], [0, 0, 1, 1], [], []>} : vector<128x32xbf16>, vector<32x64xbf16>, vector<128x64xf32> -> vector<128x64xf32>
    %c0_3 = arith.constant 0 : index
    %c0_4 = arith.constant 0 : index
    %3 = vector.load %arg3[%c0_3, %c0_4] : memref<1x64xf32, #tpu.memory_space<vmem>>, vector<1x64xf32>
    %4 = vector.broadcast %3 : vector<1x64xf32> to vector<128x64xf32>
    %5 = arith.addf %2, %4 : vector<128x64xf32>
    %6 = vector.extract_strided_slice %5 {offsets = [0, 0], sizes = [128, 32], strides = [1, 1]} : vector<128x64xf32> to vector<128x32xf32>
    %7 = arith.truncf %6 : vector<128x32xf32> to vector<128x32xbf16>
    %c0_5 = arith.constant 0 : index
    %c0_6 = arith.constant 0 : index
    %8 = vector.load %arg4[%c0_5, %c0_6] : memref<128x32xbf16, #tpu.memory_space<vmem>>, vector<128x32xbf16>
    tpu.vector_store %arg4[%c0_5, %c0_6], %7 {strides = array<i32>} : memref<128x32xbf16, #tpu.memory_space<vmem>>, vector<128x32xbf16>,
    %9 = vector.extract_strided_slice %5 {offsets = [0, 32], sizes = [128, 32], strides = [1, 1]} : vector<128x64xf32> to vector<128x32xf32>
    %c0_7 = arith.constant 0 : index
    %c0_8 = arith.constant 0 : index
    %10 = vector.load %arg5[%c0_7, %c0_8] : memref<128x32xf32, #tpu.memory_space<vmem>>, vector<128x32xf32>
    tpu.vector_store %arg5[%c0_7, %c0_8], %9 {strides = array<i32>} : memref<128x32xf32, #tpu.memory_space<vmem>>, vector<128x32xf32>,
    return
  }
  func.func @transform_0(%arg0: i32) -> (i32, i32) {
    %c0_i32 = arith.constant 0 : i32
    %c0_i32_0 = arith.constant 0 : i32
    return %arg0, %c0_i32 : i32, i32
  }
  func.func @transform_1(%arg0: i32) -> (i32, i32) {
    %c0_i32 = arith.constant 0 : i32
    %c0_i32_0 = arith.constant 0 : i32
    %c0_i32_1 = arith.constant 0 : i32
    return %c0_i32, %c0_i32_0 : i32, i32
  }
  func.func @transform_2(%arg0: i32) -> (i32, i32) {
    %c0_i32 = arith.constant 0 : i32
    %c0_i32_0 = arith.constant 0 : i32
    %c0_i32_1 = arith.constant 0 : i32
    return %c0_i32, %c0_i32_0 : i32, i32
  }
  func.func @transform_3(%arg0: i32) -> (i32, i32) {
    %c0_i32 = arith.constant 0 : i32
    %c0_i32_0 = arith.constant 0 : i32
    return %arg0, %c0_i32 : i32, i32
  }
  func.func @transform_4(%arg0: i32) -> (i32, i32) {
    %c0_i32 = arith.constant 0 : i32
    %c0_i32_0 = arith.constant 0 : i32
    return %arg0, %c0_i32 : i32, i32
  }
}

</mosaic_0001>

<llo_original>
// kernel: tpu_custom_call.1
$region0: #{tpu_custom_call.1}
  #allocation0 [shape = 'u32[]', space=smem, size = 0x4, offset = 0x4, fixed_abs, tag = 'smem constant byte address 0x4 - core index']
  #allocation1 [shape = 'u32[144,128]{1,0:T(1,128)}', space=vmem, size = 0x12000, scoped, tag = 'internal scratch']
  %s0 = inlined_call_operand.vmem [shape: bf16[256,32], index: 0, kind: input, shape index: {}]
  %s1 = inlined_call_operand.vmem [shape: bf16[32,64], index: 1, kind: input, shape index: {}]
  %s2 = inlined_call_operand.vmem [shape: f32[1,64], index: 2, kind: input, shape index: {}]
  %s3 = inlined_call_operand.vmem [shape: bf16[256,32], index: 3, kind: output, shape index: {0}]
  %s4 = inlined_call_operand.vmem [shape: f32[256,32], index: 4, kind: output, shape index: {1}]
  %5 = xla_tuple %s3, %s4
  %s6 = sld [smem:[#allocation0]]
  $region53: #{tpu_custom_call.1} parent=0
    _
  %s8 = ssub.s32 1, %s6
  %s9 = scalar_select 0, %s8, %s6
  loop: start=0, step=1, limit=4
  $region2: #{tpu_custom_call.1} parent=0 // loop_pre_header
    _
  $region3: #{tpu_custom_call.1} parent=0 // loop_header
    %s11 = sphi 0, %s15
    %p12 = scmp.ge.s32.totalorder %s11, 4
    %s21 = sphi 0, %s23
    %s24 = sphi 0, %s21
    %s25 = sphi 0, %s24
    %s41 = sphi 0, %s25
    %s45 = sphi 0, %s45
    %s47 = sphi 0, %s45
    %s48 = sphi 0, %s47
    %s62 = sphi 0, %s48
    %s66 = sphi 0, %s66
    %s68 = sphi 0, %s66
    %s69 = sphi 0, %s68
    %s83 = sphi 0, %s69
    %s89 = sphi 0, %s91
    %s92 = sphi 0, %s89
    %s93 = sphi 0, %s92
    %s109 = sphi 0, %s93
    %s115 = sphi 0, %s117
    %s118 = sphi 0, %s115
    %s119 = sphi 0, %s118
    %s135 = sphi 0, %s119
  $region4: #{tpu_custom_call.1} parent=0 // loop_header_branch
    %14 = sbr.rel (%p12) target = $region8
  $region5: #{tpu_custom_call.1} parent=0 // loop_body
    %s16 = ssub.s32 %s11, 1
    %s17 = ssub.s32 %s11, 2
    %s18 = sadd.s32 %s11, 1
    %s19 = ssub.s32 %s11, %s18
    %p20 = scmp.eq.s32.totalorder %s19, 0
    %s22 = sadd.s32 %s21, 1
    %s23 = scalar_select %p20, %s21, %s22
    %p26 = pneg %p20
    %p27 = scmp.eq.s32.totalorder %s11, 1
    %p28 = por %p26, %p27
    %p29 = scmp.ne.s32.totalorder %s21, %s24
    %p30 = scmp.eq.s32.totalorder %s11, 0
    %p31 = por %p29, %p30
    %p32 = scmp.ne.s32.totalorder %s21, %s24
    %p33 = scmp.eq.s32.totalorder %s16, 1
    %p34 = por %p32, %p33
    %p35 = scmp.ne.s32.totalorder %s24, %s25
    %p36 = scmp.eq.s32.totalorder %s16, 0
    %p37 = por %p35, %p36
    %p38 = scmp.ne.s32.totalorder %s24, %s25
    %p39 = scmp.eq.s32.totalorder %s17, 1
    %p40 = por %p38, %p39
    %p42 = scmp.ne.s32.totalorder %s25, %s41
    %p43 = scmp.eq.s32.totalorder %s17, 0
    %p44 = por %p42, %p43
    %s46 = sadd.s32 %s45, 1
    %p49 = scmp.eq.s32.totalorder %s11, 1
    %p50 = scmp.ne.s32.totalorder %s45, %s47
    %p51 = scmp.eq.s32.totalorder %s11, 0
    %p52 = por %p50, %p51
    %p53 = scmp.ne.s32.totalorder %s45, %s47
    %p54 = scmp.eq.s32.totalorder %s16, 1
    %p55 = por %p53, %p54
    %p56 = scmp.ne.s32.totalorder %s47, %s48
    %p57 = scmp.eq.s32.totalorder %s16, 0
    %p58 = por %p56, %p57
    %p59 = scmp.ne.s32.totalorder %s47, %s48
    %p60 = scmp.eq.s32.totalorder %s17, 1
    %p61 = por %p59, %p60
    %p63 = scmp.ne.s32.totalorder %s48, %s62
    %p64 = scmp.eq.s32.totalorder %s17, 0
    %p65 = por %p63, %p64
    %s67 = sadd.s32 %s66, 1
    %p70 = scmp.eq.s32.totalorder %s11, 1
    %p71 = scmp.ne.s32.totalorder %s66, %s68
    %p72 = scmp.eq.s32.totalorder %s11, 0
    %p73 = por %p71, %p72
    %p74 = scmp.ne.s32.totalorder %s66, %s68
    %p75 = scmp.eq.s32.totalorder %s16, 1
    %p76 = por %p74, %p75
    %p77 = scmp.ne.s32.totalorder %s68, %s69
    %p78 = scmp.eq.s32.totalorder %s16, 0
    %p79 = por %p77, %p78
    %p80 = scmp.ne.s32.totalorder %s68, %s69
    %p81 = scmp.eq.s32.totalorder %s17, 1
    %p82 = por %p80, %p81
    %p84 = scmp.ne.s32.totalorder %s69, %s83
    %p85 = scmp.eq.s32.totalorder %s17, 0
    %p86 = por %p84, %p85
    %s87 = ssub.s32 %s11, %s18
    %p88 = scmp.eq.s32.totalorder %s87, 0
    %s90 = sadd.s32 %s89, 1
    %s91 = scalar_select %p88, %s89, %s90
    %p94 = pneg %p88
    %p95 = scmp.eq.s32.totalorder %s11, 1
    %p96 = por %p94, %p95
    %p97 = scmp.ne.s32.totalorder %s89, %s92
    %p98 = scmp.eq.s32.totalorder %s11, 0
    %p99 = por %p97, %p98
    %p100 = scmp.ne.s32.totalorder %s89, %s92
    %p101 = scmp.eq.s32.totalorder %s16, 1
    %p102 = por %p100, %p101
    %p103 = scmp.ne.s32.totalorder %s92, %s93
    %p104 = scmp.eq.s32.totalorder %s16, 0
    %p105 = por %p103, %p104
    %p106 = scmp.ne.s32.totalorder %s92, %s93
    %p107 = scmp.eq.s32.totalorder %s17, 1
    %p108 = por %p106, %p107
    %p110 = scmp.ne.s32.totalorder %s93, %s109
    %p111 = scmp.eq.s32.totalorder %s17, 0
    %p112 = por %p110, %p111
    %s113 = ssub.s32 %s11, %s18
    %p114 = scmp.eq.s32.totalorder %s113, 0
    %s116 = sadd.s32 %s115, 1
    %s117 = scalar_select %p114, %s115, %s116
    %p120 = pneg %p114
    %p121 = scmp.eq.s32.totalorder %s11, 1
    %p122 = por %p120, %p121
    %p123 = scmp.ne.s32.totalorder %s115, %s118
    %p124 = scmp.eq.s32.totalorder %s11, 0
    %p125 = por %p123, %p124
    %p126 = scmp.ne.s32.totalorder %s115, %s118
    %p127 = scmp.eq.s32.totalorder %s16, 1
    %p128 = por %p126, %p127
    %p129 = scmp.ne.s32.totalorder %s118, %s119
    %p130 = scmp.eq.s32.totalorder %s16, 0
    %p131 = por %p129, %p130
    %p132 = scmp.ne.s32.totalorder %s118, %s119
    %p133 = scmp.eq.s32.totalorder %s17, 1
    %p134 = por %p132, %p133
    %p136 = scmp.ne.s32.totalorder %s119, %s135
    %p137 = scmp.eq.s32.totalorder %s17, 0
    %p138 = por %p136, %p137
    %p139 = scmp.le.s32.totalorder 1, %s11
    %p140 = scmp.lt.s32.totalorder %s11, 3
    %p141 = pnand %p139, %p140
    %p142 = pneg %p141
    // Predicated region
    $region9: #{tpu_custom_call.1} parent=5 // pred_check
      _
    $region10: #{tpu_custom_call.1} parent=5 // pred_check_branch
      %144 = sbr.rel (%p141) target = $region12
    $region11: #{tpu_custom_call.1} parent=5 // pred_region
      %s145 = ssub.s32 %s11, 1
      // Predicated region
      $region13: #{tpu_custom_call.1} parent=11 // pred_check
        %p146 = pneg %p58
      $region14: #{tpu_custom_call.1} parent=11 // pred_check_branch
        %148 = sbr.rel (%p146) target = $region16
      $region15: #{tpu_custom_call.1} parent=11 // pred_region
        _
      $region16: #{tpu_custom_call.1} parent=11 // pred_fallthru
        _
      // Predicated region
      $region17: #{tpu_custom_call.1} parent=11 // pred_check
        %p149 = pneg %p79
      $region18: #{tpu_custom_call.1} parent=11 // pred_check_branch
        %151 = sbr.rel (%p149) target = $region20
      $region19: #{tpu_custom_call.1} parent=11 // pred_region
        _
      $region20: #{tpu_custom_call.1} parent=11 // pred_fallthru
        _
    $region12: #{tpu_custom_call.1} parent=5 // pred_fallthru
      _
    %p152 = scmp.lt.s32.totalorder %s11, 2
    // Predicated region
    $region21: #{tpu_custom_call.1} parent=5 // pred_check
      %p153 = pneg %p152
    $region22: #{tpu_custom_call.1} parent=5 // pred_check_branch
      %155 = sbr.rel (%p153) target = $region24
    $region23: #{tpu_custom_call.1} parent=5 // pred_region
      // Predicated region
      $region25: #{tpu_custom_call.1} parent=23 // pred_check
        %p156 = pneg %p31
      $region26: #{tpu_custom_call.1} parent=23 // pred_check_branch
        %158 = sbr.rel (%p156) target = $region28
      $region27: #{tpu_custom_call.1} parent=23 // pred_region
        %s159 = smul.u32 16, %s11
        %p160 = scmp.lt.s32.totalorder %s159, 31
        %s161 = scalar_select %p160, %s159, 31
        %s162 = smul.addr %s161, 4
        %s163 = scalar_lea.vmem %s0, %s162
        %s164 = smul.u32 16, %s11
      $region28: #{tpu_custom_call.1} parent=23 // pred_fallthru
        _
    $region24: #{tpu_custom_call.1} parent=5 // pred_fallthru
      _
    %p165 = scmp.le.s32.totalorder 1, %s11
    %p166 = scmp.lt.s32.totalorder %s11, 3
    %p167 = pnand %p165, %p166
    %p168 = pneg %p167
    // Predicated region
    $region29: #{tpu_custom_call.1} parent=5 // pred_check
      _
    $region30: #{tpu_custom_call.1} parent=5 // pred_check_branch
      %170 = sbr.rel (%p167) target = $region32
    $region31: #{tpu_custom_call.1} parent=5 // pred_region
      %s171 = ssub.s32 %s11, 1
      %s172 = smul.u32 16, %s16
      %p173 = scmp.lt.s32.totalorder %s172, 31
      %s174 = scalar_select %p173, %s172, 31
      %s175 = smul.addr %s174, 4
      %s176 = scalar_lea.vmem %s0, %s175
      %p177 = pneg %p37
      %p178 = pneg %p34
      %p179 = pneg %p58
      %p180 = pneg %p55
      %p181 = pneg %p79
      %p182 = pneg %p76
      %p183 = pneg %p105
      %p184 = pneg %p102
      %s185 = smul.u32 16, %s16
      %p186 = scmp.lt.s32.totalorder %s185, 31
      %s187 = scalar_select %p186, %s185, 31
      %s188 = smul.addr %s187, 4
      %s189 = scalar_lea.vmem %s3, %s188
      %p190 = pneg %p131
      %p191 = pneg %p128
      %s192 = smul.u32 16, %s16
      %p193 = scmp.lt.s32.totalorder %s192, 31
      %s194 = scalar_select %p193, %s192, 31
      %s195 = smul.addr %s194, 8
      %s196 = scalar_lea.vmem %s4, %s195
      %s197 = smul.u32 16, %s16
      %p198 = scmp.lt.s32.totalorder %s197, 31
      %s199 = scalar_select %p198, %s197, 31
      %s200 = smul.addr %s199, 4
      %s201 = scalar_lea.vmem %s0, %s200
      %s202 = smul.u32 16, %s16
      %s203 = smul.u32 16, %s16
      %p204 = scmp.lt.s32.totalorder %s203, 31
      %s205 = scalar_select %p204, %s203, 31
      %s206 = smul.addr %s205, 4
      %s207 = scalar_lea.vmem %s3, %s206
      %s208 = smul.u32 16, %s16
      %s209 = smul.u32 16, %s16
      %p210 = scmp.lt.s32.totalorder %s209, 31
      %s211 = scalar_select %p210, %s209, 31
      %s212 = smul.addr %s211, 8
      %s213 = scalar_lea.vmem %s4, %s212
      %s214 = smul.u32 16, %s16
      %v216 = vld [vmem:[%s201] sm:$0xf]
      %v217 = vld [vmem:[%s201 + $0x4] sm:$0xf]
      %v218 = vld [vmem:[%s201 + $0x8] sm:$0xf]
      %v219 = vld [vmem:[%s201 + $0xc] sm:$0xf]
      %v220 = vld [vmem:[%s201 + $0x10] sm:$0xf]
      %v221 = vld [vmem:[%s201 + $0x14] sm:$0xf]
      %v222 = vld [vmem:[%s201 + $0x18] sm:$0xf]
      %v223 = vld [vmem:[%s201 + $0x1c] sm:$0xf]
      %v224 = vld [vmem:[%s201 + $0x20] sm:$0xf]
      %v225 = vld [vmem:[%s201 + $0x24] sm:$0xf]
      %v226 = vld [vmem:[%s201 + $0x28] sm:$0xf]
      %v227 = vld [vmem:[%s201 + $0x2c] sm:$0xf]
      %v228 = vld [vmem:[%s201 + $0x30] sm:$0xf]
      %v229 = vld [vmem:[%s201 + $0x34] sm:$0xf]
      %v230 = vld [vmem:[%s201 + $0x38] sm:$0xf]
      %v231 = vld [vmem:[%s201 + $0x3c] sm:$0xf]
      %v232 = vld [vmem:[%s1] sm:$0xf]
      %v233 = vld [vmem:[%s1 + $0x4] sm:$0xf]
      %v234 = vld [vmem:[%s1 + $0x8] sm:$0xf]
      %v235 = vld [vmem:[%s1 + $0xc] sm:$0xf]
      %v236 = vld [vmem:[%s2] sm:$0x1]
      %v238 = vlaneseq
      %v239 = vshrl.u32 %v238, 7
      %v240 = vsub.s32 0, %v239
      %v241 = vrot.slane %v236, %v240
      %v259 = vunpack.c.l.b16 %v216
      %v260 = vunpack.c.l.b16 %v217
      %v261 = vunpack.c.l.b16 %v218
      %v262 = vunpack.c.l.b16 %v219
      %v263 = vunpack.c.l.b16 %v220
      %v264 = vunpack.c.l.b16 %v221
      %v265 = vunpack.c.l.b16 %v222
      %v266 = vunpack.c.l.b16 %v223
      %v267 = vunpack.c.l.b16 %v224
      %v268 = vunpack.c.l.b16 %v225
      %v269 = vunpack.c.l.b16 %v226
      %v270 = vunpack.c.l.b16 %v227
      %v271 = vunpack.c.l.b16 %v228
      %v272 = vunpack.c.l.b16 %v229
      %v273 = vunpack.c.l.b16 %v230
      %v274 = vunpack.c.l.b16 %v231
      %v275 = vpack.c.b16 %v260, %v259
      %v276 = vpack.c.b16 %v262, %v261
      %v277 = vpack.c.b16 %v264, %v263
      %v278 = vpack.c.b16 %v266, %v265
      %v279 = vpack.c.b16 %v268, %v267
      %v280 = vpack.c.b16 %v270, %v269
      %v281 = vpack.c.b16 %v272, %v271
      %v282 = vpack.c.b16 %v274, %v273
      %v287 = vunpack.c.l.b16 %v232
      %v288 = vunpack.c.l.b16 %v233
      %v289 = vunpack.c.l.b16 %v234
      %v290 = vunpack.c.l.b16 %v235
      %v291 = vpack.c.b16 %v288, %v287
      %v292 = vpack.c.b16 %v290, %v289
      %vm295 = vcmask 261120
      %v297 = vsel %vm295, %v275, 0
      %v300 = vsel %vm295, %v276, 0
      %v303 = vsel %vm295, %v277, 0
      %v306 = vsel %vm295, %v278, 0
      %v309 = vsel %vm295, %v279, 0
      %v312 = vsel %vm295, %v280, 0
      %v315 = vsel %vm295, %v281, 0
      %v318 = vsel %vm295, %v282, 0
      %320 = vmatprep.subr.bf16.mxu0 0
      %321 = vmatpush1.bf16.msra.mxu0 %v291
      %322 = vmatprep.subr.bf16.mxu0 0
      %323 = vmatpush1.bf16.msra.mxu0 %v292
      %324 = vmatprep.subr.bf16.mxu0 0
      %325 = vmatpush1.bf16.msra.mxu0 0
      %326 = vmatprep.subr.bf16.mxu0 0
      %327 = vmatpush1.bf16.msra.mxu0 0
      %328 = vmatprep.subr.bf16.mxu0 0
      %329 = vmatpush1.bf16.msra.mxu0 0
      %330 = vmatprep.subr.bf16.mxu0 0
      %331 = vmatpush1.bf16.msra.mxu0 0
      %332 = vmatprep.subr.bf16.mxu0 0
      %333 = vmatpush1.bf16.msra.mxu0 0
      %334 = vmatprep.subr.bf16.mxu0 0
      %335 = vmatpush1.bf16.msra.mxu0 0
      %336 = vmatprep.subr.bf16.mxu0 0
      %337 = vmatpush1.bf16.msra.mxu0 0
      %338 = vmatprep.subr.bf16.mxu0 0
      %339 = vmatpush1.bf16.msra.mxu0 0
      %340 = vmatprep.subr.bf16.mxu0 0
      %341 = vmatpush1.bf16.msra.mxu0 0
      %342 = vmatprep.subr.bf16.mxu0 0
      %343 = vmatpush1.bf16.msra.mxu0 0
      %344 = vmatprep.subr.bf16.mxu0 0
      %345 = vmatpush1.bf16.msra.mxu0 0
      %346 = vmatprep.subr.bf16.mxu0 0
      %347 = vmatpush1.bf16.msra.mxu0 0
      %348 = vmatprep.subr.bf16.mxu0 0
      %349 = vmatpush1.bf16.msra.mxu0 0
      %350 = vmatprep.subr.bf16.mxu0 0
      %351 = vmatpush1.bf16.msra.mxu0 0
      %352 = vmatprep.mubr.bf16.mxu0 0
      %353 = vmatmul.mubr.bf16.gmra.mrb[0].mxu0 %v297
      %v354 = vpop.f32.mrb[0].mxu0
      %v355 = vadd.f32 %v241, %v354
      %v356 = vpop.f32.mrb[0].mxu0
      %v357 = vpop.f32.mrb[0].mxu0
      %v358 = vadd.f32 %v241, %v357
      %v359 = vpop.f32.mrb[0].mxu0
      %360 = vmatprep.mubr.bf16.mxu0 0
      %361 = vmatmul.mubr.bf16.gmra.mrb[0].mxu0 %v300
      %v362 = vpop.f32.mrb[0].mxu0
      %v363 = vadd.f32 %v241, %v362
      %v364 = vpop.f32.mrb[0].mxu0
      %v365 = vpop.f32.mrb[0].mxu0
      %v366 = vadd.f32 %v241, %v365
      %v367 = vpop.f32.mrb[0].mxu0
      %368 = vmatprep.mubr.bf16.mxu0 0
      %369 = vmatmul.mubr.bf16.gmra.mrb[0].mxu0 %v303
      %v370 = vpop.f32.mrb[0].mxu0
      %v371 = vadd.f32 %v241, %v370
      %v372 = vpop.f32.mrb[0].mxu0
      %v373 = vpop.f32.mrb[0].mxu0
      %v374 = vadd.f32 %v241, %v373
      %v375 = vpop.f32.mrb[0].mxu0
      %376 = vmatprep.mubr.bf16.mxu0 0
      %377 = vmatmul.mubr.bf16.gmra.mrb[0].mxu0 %v306
      %v378 = vpop.f32.mrb[0].mxu0
      %v379 = vadd.f32 %v241, %v378
      %v380 = vpop.f32.mrb[0].mxu0
      %v381 = vpop.f32.mrb[0].mxu0
      %v382 = vadd.f32 %v241, %v381
      %v383 = vpop.f32.mrb[0].mxu0
      %384 = vmatprep.mubr.bf16.mxu0 0
      %385 = vmatmul.mubr.bf16.gmra.mrb[0].mxu0 %v309
      %v386 = vpop.f32.mrb[0].mxu0
      %v387 = vadd.f32 %v241, %v386
      %v388 = vpop.f32.mrb[0].mxu0
      %v389 = vpop.f32.mrb[0].mxu0
      %v390 = vadd.f32 %v241, %v389
      %v391 = vpop.f32.mrb[0].mxu0
      %392 = vmatprep.mubr.bf16.mxu0 0
      %393 = vmatmul.mubr.bf16.gmra.mrb[0].mxu0 %v312
      %v394 = vpop.f32.mrb[0].mxu0
      %v395 = vadd.f32 %v241, %v394
      %v396 = vpop.f32.mrb[0].mxu0
      %v397 = vpop.f32.mrb[0].mxu0
      %v398 = vadd.f32 %v241, %v397
      %v399 = vpop.f32.mrb[0].mxu0
      %400 = vmatprep.mubr.bf16.mxu0 0
      %401 = vmatmul.mubr.bf16.gmra.mrb[0].mxu0 %v315
      %v402 = vpop.f32.mrb[0].mxu0
      %v403 = vadd.f32 %v241, %v402
      %v404 = vpop.f32.mrb[0].mxu0
      %v405 = vpop.f32.mrb[0].mxu0
      %v406 = vadd.f32 %v241, %v405
      %v407 = vpop.f32.mrb[0].mxu0
      %408 = vmatprep.mubr.bf16.mxu0 0
      %409 = vmatmul.mubr.bf16.gmra.mrb[0].mxu0 %v318
      %v410 = vpop.f32.mrb[0].mxu0
      %v411 = vadd.f32 %v241, %v410
      %v412 = vpop.f32.mrb[0].mxu0
      %v413 = vpop.f32.mrb[0].mxu0
      %v414 = vadd.f32 %v241, %v413
      %v415 = vpop.f32.mrb[0].mxu0
      %416 = vdwg.mxu0
      %v417 = vpack.c.bf16 %v358, %v355
      %v418 = vpack.c.bf16 %v366, %v363
      %v419 = vpack.c.bf16 %v374, %v371
      %v420 = vpack.c.bf16 %v382, %v379
      %v421 = vpack.c.bf16 %v390, %v387
      %v422 = vpack.c.bf16 %v398, %v395
      %v423 = vpack.c.bf16 %v406, %v403
      %v424 = vpack.c.bf16 %v414, %v411
      %v433 = vunpack.c.l.b16 %v417
      %v434 = vunpack.c.h.b16 %v417
      %v435 = vunpack.c.l.b16 %v418
      %v436 = vunpack.c.h.b16 %v418
      %v437 = vunpack.c.l.b16 %v419
      %v438 = vunpack.c.h.b16 %v419
      %v439 = vunpack.c.l.b16 %v420
      %v440 = vunpack.c.h.b16 %v420
      %v441 = vunpack.c.l.b16 %v421
      %v442 = vunpack.c.h.b16 %v421
      %v443 = vunpack.c.l.b16 %v422
      %v444 = vunpack.c.h.b16 %v422
      %v445 = vunpack.c.l.b16 %v423
      %v446 = vunpack.c.h.b16 %v423
      %v447 = vunpack.c.l.b16 %v424
      %v448 = vunpack.c.h.b16 %v424
      %v449 = vpack.c.b16 %v433, %v433
      %v450 = vpack.c.b16 %v434, %v434
      %v451 = vpack.c.b16 %v435, %v435
      %v452 = vpack.c.b16 %v436, %v436
      %v453 = vpack.c.b16 %v437, %v437
      %v454 = vpack.c.b16 %v438, %v438
      %v455 = vpack.c.b16 %v439, %v439
      %v456 = vpack.c.b16 %v440, %v440
      %v457 = vpack.c.b16 %v441, %v441
      %v458 = vpack.c.b16 %v442, %v442
      %v459 = vpack.c.b16 %v443, %v443
      %v460 = vpack.c.b16 %v444, %v444
      %v461 = vpack.c.b16 %v445, %v445
      %v462 = vpack.c.b16 %v446, %v446
      %v463 = vpack.c.b16 %v447, %v447
      %v464 = vpack.c.b16 %v448, %v448
      %vm481 = vcmask 257024
      %482 = vst.msk [vmem:[%s207] sm:$0xf] %vm481, %v449
      %483 = vst.msk [vmem:[%s207 + $0x4] sm:$0xf] %vm481, %v450
      %484 = vst.msk [vmem:[%s207 + $0x8] sm:$0xf] %vm481, %v451
      %485 = vst.msk [vmem:[%s207 + $0xc] sm:$0xf] %vm481, %v452
      %486 = vst.msk [vmem:[%s207 + $0x10] sm:$0xf] %vm481, %v453
      %487 = vst.msk [vmem:[%s207 + $0x14] sm:$0xf] %vm481, %v454
      %488 = vst.msk [vmem:[%s207 + $0x18] sm:$0xf] %vm481, %v455
      %489 = vst.msk [vmem:[%s207 + $0x1c] sm:$0xf] %vm481, %v456
      %490 = vst.msk [vmem:[%s207 + $0x20] sm:$0xf] %vm481, %v457
      %491 = vst.msk [vmem:[%s207 + $0x24] sm:$0xf] %vm481, %v458
      %492 = vst.msk [vmem:[%s207 + $0x28] sm:$0xf] %vm481, %v459
      %493 = vst.msk [vmem:[%s207 + $0x2c] sm:$0xf] %vm481, %v460
      %494 = vst.msk [vmem:[%s207 + $0x30] sm:$0xf] %vm481, %v461
      %495 = vst.msk [vmem:[%s207 + $0x34] sm:$0xf] %vm481, %v462
      %496 = vst.msk [vmem:[%s207 + $0x38] sm:$0xf] %vm481, %v463
      %497 = vst.msk [vmem:[%s207 + $0x3c] sm:$0xf] %vm481, %v464
      %514 = vrot.lane.b32.xlu0 %v355, 96
      %v515 = vpop.permute.xlu0 %514
      %516 = vrot.lane.b32.xlu0 %v358, 96
      %v517 = vpop.permute.xlu0 %516
      %518 = vrot.lane.b32.xlu0 %v363, 96
      %v519 = vpop.permute.xlu0 %518
      %520 = vrot.lane.b32.xlu0 %v366, 96
      %v521 = vpop.permute.xlu0 %520
      %522 = vrot.lane.b32.xlu0 %v371, 96
      %v523 = vpop.permute.xlu0 %522
      %524 = vrot.lane.b32.xlu0 %v374, 96
      %v525 = vpop.permute.xlu0 %524
      %526 = vrot.lane.b32.xlu0 %v379, 96
      %v527 = vpop.permute.xlu0 %526
      %528 = vrot.lane.b32.xlu0 %v382, 96
      %v529 = vpop.permute.xlu0 %528
      %530 = vrot.lane.b32.xlu0 %v387, 96
      %v531 = vpop.permute.xlu0 %530
      %532 = vrot.lane.b32.xlu0 %v390, 96
      %v533 = vpop.permute.xlu0 %532
      %534 = vrot.lane.b32.xlu0 %v395, 96
      %v535 = vpop.permute.xlu0 %534
      %536 = vrot.lane.b32.xlu0 %v398, 96
      %v537 = vpop.permute.xlu0 %536
      %538 = vrot.lane.b32.xlu0 %v403, 96
      %v539 = vpop.permute.xlu0 %538
      %540 = vrot.lane.b32.xlu0 %v406, 96
      %v541 = vpop.permute.xlu0 %540
      %542 = vrot.lane.b32.xlu0 %v411, 96
      %v543 = vpop.permute.xlu0 %542
      %544 = vrot.lane.b32.xlu0 %v414, 96
      %v545 = vpop.permute.xlu0 %544
      %562 = vst.msk [vmem:[%s213] sm:$0xff] %vm295, %v515
      %563 = vst.msk [vmem:[%s213 + $0x8] sm:$0xff] %vm295, %v517
      %564 = vst.msk [vmem:[%s213 + $0x10] sm:$0xff] %vm295, %v519
      %565 = vst.msk [vmem:[%s213 + $0x18] sm:$0xff] %vm295, %v521
      %566 = vst.msk [vmem:[%s213 + $0x20] sm:$0xff] %vm295, %v523
      %567 = vst.msk [vmem:[%s213 + $0x28] sm:$0xff] %vm295, %v525
      %568 = vst.msk [vmem:[%s213 + $0x30] sm:$0xff] %vm295, %v527
      %569 = vst.msk [vmem:[%s213 + $0x38] sm:$0xff] %vm295, %v529
      %570 = vst.msk [vmem:[%s213 + $0x40] sm:$0xff] %vm295, %v531
      %571 = vst.msk [vmem:[%s213 + $0x48] sm:$0xff] %vm295, %v533
      %572 = vst.msk [vmem:[%s213 + $0x50] sm:$0xff] %vm295, %v535
      %573 = vst.msk [vmem:[%s213 + $0x58] sm:$0xff] %vm295, %v537
      %574 = vst.msk [vmem:[%s213 + $0x60] sm:$0xff] %vm295, %v539
      %575 = vst.msk [vmem:[%s213 + $0x68] sm:$0xff] %vm295, %v541
      %576 = vst.msk [vmem:[%s213 + $0x70] sm:$0xff] %vm295, %v543
      %577 = vst.msk [vmem:[%s213 + $0x78] sm:$0xff] %vm295, %v545
      %s578 = smul.u32 16, %s16
      %p579 = scmp.lt.s32.totalorder %s578, 31
      %s580 = scalar_select %p579, %s578, 31
      %s581 = smul.addr %s580, 4
      %s582 = scalar_lea.vmem %s3, %s581
      %s583 = smul.u32 16, %s16
      %p584 = scmp.lt.s32.totalorder %s583, 31
      %s585 = scalar_select %p584, %s583, 31
      %s586 = smul.addr %s585, 8
      %s587 = scalar_lea.vmem %s4, %s586
      // Predicated region
      $region33: #{tpu_custom_call.1} parent=31 // pred_check
        %p588 = pneg %p102
      $region34: #{tpu_custom_call.1} parent=31 // pred_check_branch
        %590 = sbr.rel (%p588) target = $region36
      $region35: #{tpu_custom_call.1} parent=31 // pred_region
        %s591 = smul.u32 16, %s16
      $region36: #{tpu_custom_call.1} parent=31 // pred_fallthru
        _
      // Predicated region
      $region37: #{tpu_custom_call.1} parent=31 // pred_check
        %p592 = pneg %p128
      $region38: #{tpu_custom_call.1} parent=31 // pred_check_branch
        %594 = sbr.rel (%p592) target = $region40
      $region39: #{tpu_custom_call.1} parent=31 // pred_region
        %s595 = smul.u32 16, %s16
      $region40: #{tpu_custom_call.1} parent=31 // pred_fallthru
        _
    $region32: #{tpu_custom_call.1} parent=5 // pred_fallthru
      _
    %p596 = scmp.le.s32.totalorder 2, %s11
    // Predicated region
    $region41: #{tpu_custom_call.1} parent=5 // pred_check
      %p597 = pneg %p596
    $region42: #{tpu_custom_call.1} parent=5 // pred_check_branch
      %599 = sbr.rel (%p597) target = $region44
    $region43: #{tpu_custom_call.1} parent=5 // pred_region
      %s600 = ssub.s32 %s11, 2
      // Predicated region
      $region45: #{tpu_custom_call.1} parent=43 // pred_check
        %p601 = pneg %p108
      $region46: #{tpu_custom_call.1} parent=43 // pred_check_branch
        %603 = sbr.rel (%p601) target = $region48
      $region47: #{tpu_custom_call.1} parent=43 // pred_region
        %s604 = smul.u32 16, %s17
        %p605 = scmp.lt.s32.totalorder %s604, 31
        %s606 = scalar_select %p605, %s604, 31
        %s607 = smul.addr %s606, 4
        %s608 = scalar_lea.vmem %s3, %s607
      $region48: #{tpu_custom_call.1} parent=43 // pred_fallthru
        _
      // Predicated region
      $region49: #{tpu_custom_call.1} parent=43 // pred_check
        %p609 = pneg %p134
      $region50: #{tpu_custom_call.1} parent=43 // pred_check_branch
        %611 = sbr.rel (%p609) target = $region52
      $region51: #{tpu_custom_call.1} parent=43 // pred_region
        %s612 = smul.u32 16, %s17
        %p613 = scmp.lt.s32.totalorder %s612, 31
        %s614 = scalar_select %p613, %s612, 31
        %s615 = smul.addr %s614, 8
        %s616 = scalar_lea.vmem %s4, %s615
      $region52: #{tpu_custom_call.1} parent=43 // pred_fallthru
        _
    $region44: #{tpu_custom_call.1} parent=5 // pred_fallthru
      _
  $region6: #{tpu_custom_call.1} parent=0 // loop_footer
    %s15 = sadd.s32 1, %s11
  $region7: #{tpu_custom_call.1} parent=0 // loop_footer_branch
    %10 = sbr.rel target = $region3
  $region8: #{tpu_custom_call.1} parent=0 // loop_exit
    _

</llo_original>
